<compile_context>
chip_gen: v6e
topology: v6e:2x2x1
jax: 0.10.0
libtpu: 0.0.40
codegen_flags: <defaults>
</compile_context>

<pallas_src>
import functools

import jax
import jax.numpy as jnp
from jax.experimental import pallas as pl
from jax.experimental.pallas import tpu as pltpu

_LANE = 128       # lane width of the packed parameter slab and the output
_BIAS_ROWS = 8    # one sublane-aligned block holding gamma, beta, b2, bh


def _round_up(x, m):
    return (x + m - 1) // m * m


# --------------------------------------------------------------------------
# Kernel
# --------------------------------------------------------------------------
def actor_kernel(state_ref, params_ref, out_ref,
                 sum_ref, ssq_ref, scale_ref, shift_ref,
                 *, s8, n_actions, inv_batch, matmul_dtype):
    phase = pl.program_id(0)   # 0: accumulate BN stats, 1: normalize + heads
    tile = pl.program_id(1)    # batch tile

    w1_lo, w1_hi = _BIAS_ROWS, _BIAS_ROWS + s8
    w2_lo, w2_hi = w1_hi, w1_hi + _LANE
    wh_lo, wh_hi = w2_hi, w2_hi + _LANE

    # ---- fc1 (no bias: it cancels under training-mode BatchNorm) ----------
    x = state_ref[...].astype(matmul_dtype)                      # [TB, s8]
    w1 = params_ref[w1_lo:w1_hi, :].astype(matmul_dtype)         # [s8, 128]
    h1 = jnp.dot(x, w1, preferred_element_type=jnp.float32)      # [TB, 128] f32

    @pl.when(phase == 0)
    def _accumulate_stats():
        @pl.when(tile == 0)
        def _init():
            sum_ref[...] = jnp.zeros_like(sum_ref)
            ssq_ref[...] = jnp.zeros_like(ssq_ref)
        sum_ref[...] += jnp.sum(h1, axis=0, keepdims=True)
        ssq_ref[...] += jnp.sum(h1 * h1, axis=0, keepdims=True)

    @pl.when(phase == 1)
    def _normalize_and_heads():
        @pl.when(tile == 0)
        def _finalize_stats():
            gamma = params_ref[0:1, :]
            beta = params_ref[1:2, :]
            mu = sum_ref[...] * inv_batch
            var = jnp.maximum(ssq_ref[...] * inv_batch - mu * mu, 0.0)
            scale_ref[...] = gamma * jax.lax.rsqrt(var + 1e-5)    # rsqrt -> EUP
            shift_ref[...] = beta - mu * scale_ref[...]

        # ---- bn1 (fused FMA) + relu ---------------------------------------
        h1n = jnp.maximum(h1 * scale_ref[...] + shift_ref[...], 0.0)

        # ---- fc2 + relu ----------------------------------------------------
        b2 = params_ref[2:3, :]
        w2 = params_ref[w2_lo:w2_hi, :].astype(matmul_dtype)
        h2 = jnp.maximum(
            jnp.dot(h1n.astype(matmul_dtype), w2,
                    preferred_element_type=jnp.float32) + b2, 0.0)

        # ---- fused heads: one matmul, one lane-dense [TB, 128] store -------
        bh = params_ref[3:4, :]
        wh = params_ref[wh_lo:wh_hi, :].astype(matmul_dtype)
        heads = jnp.dot(h2.astype(matmul_dtype), wh,
                        preferred_element_type=jnp.float32) + bh
        col = jax.lax.broadcasted_iota(jnp.int32, heads.shape, 1)
        # cols [0,A): mean; [A,2A): clamped log_std; [2A,128): padded zeros
        out_ref[...] = jnp.where(col >= n_actions,
                                 jnp.clip(heads, -20.0, 2.0), heads)


# --------------------------------------------------------------------------
# Parameter packing (done once, outside the kernel)
# --------------------------------------------------------------------------
def pack_params(params):
    """Pack all Actor parameters into one lane-dense [8 + S8 + 256, 128] slab.

    Layout (all f32, zero-padded):
      rows [0:8)            gamma, beta, b2, bh (fused head bias), zeros
      rows [8:8+S8)         w1   [s_dim -> 128]
      rows [8+S8:8+S8+128)  w2   [128 -> 128]
      rows [..  : .. +128)  wh = [wm || ws]  [128 -> 128]
    fc1 bias (b1) is intentionally NOT packed: it is mathematically redundant
    under training-mode BatchNorm.
    """
    w1 = params["w1"]
    s_dim, fc1 = w1.shape
    fc2 = params["w2"].shape[1]
    n_actions = params["wm"].shape[1]
    assert fc1 <= _LANE and fc2 <= _LANE and 2 * n_actions <= _LANE
    s8 = _round_up(s_dim, 8)

    def pad2(a, rows):
        return jnp.pad(a.astype(jnp.float32),
                       ((0, rows - a.shape[0]), (0, _LANE - a.shape[1])))

    bias = jnp.zeros((_BIAS_ROWS, _LANE), jnp.float32)
    bias = bias.at[0, :fc1].set(params["gamma"].reshape(-1))
    bias = bias.at[1, :fc1].set(params["beta"].reshape(-1))
    bias = bias.at[2, :fc2].set(params["b2"].reshape(-1))
    bh = jnp.concatenate([params["bm"].reshape(-1), params["bs"].reshape(-1)])
    bias = bias.at[3, :2 * n_actions].set(bh)

    w1p = pad2(w1, s8)
    w2p = pad2(params["w2"], _LANE)
    whp = pad2(jnp.concatenate([params["wm"], params["ws"]], axis=1), _LANE)

    slab = jnp.concatenate([bias, w1p, w2p, whp], axis=0)
    return slab, dict(s_dim=s_dim, n_actions=n_actions)


# --------------------------------------------------------------------------
# Wrapper
# --------------------------------------------------------------------------
def _pick_batch_tile(batch):
    for tb in (512, 256, 128):
        if batch % tb == 0:
            return tb
    return batch   # small / irregular batch: single tile


def actor_forward(state, param_slab, *, s_dim, n_actions,
                  batch_tile=None, matmul_dtype=jnp.float32):
    """state: [B, s_dim] f32; param_slab: output of pack_params()[0]."""
    batch = state.shape[0]
    s8 = _round_up(s_dim, 8)
    rows = _BIAS_ROWS + s8 + 2 * _LANE
    assert param_slab.shape == (rows, _LANE)

    if state.shape[1] != s8:                       # pad feature dim once
        state = jnp.pad(state, ((0, 0), (0, s8 - state.shape[1])))
    state = state.astype(jnp.float32)

    tb = batch_tile if batch_tile is not None else _pick_batch_tile(batch)
    assert batch % tb == 0 and (tb == batch or tb % 8 == 0)
    n_tiles = batch // tb

    kernel = functools.partial(
        actor_kernel, s8=s8, n_actions=n_actions,
        inv_batch=1.0 / batch, matmul_dtype=matmul_dtype)

    flops = 4 * batch * s8 * _LANE + 4 * batch * _LANE * _LANE
    bytes_accessed = 4 * (2 * batch * s8 + rows * _LANE + batch * _LANE)

    out = pl.pallas_call(
        kernel,
        out_shape=jax.ShapeDtypeStruct((batch, _LANE), jnp.float32),
        grid_spec=pltpu.PrefetchScalarGridSpec(
            num_scalar_prefetch=0,
            grid=(2, n_tiles),                     # (BN phase, batch tile)
            in_specs=[
                pl.BlockSpec((tb, s8), lambda p, t: (t, 0)),
                pl.BlockSpec((rows, _LANE), lambda p, t: (0, 0)),  # resident
            ],
            out_specs=pl.BlockSpec((tb, _LANE), lambda p, t: (t, 0)),
            scratch_shapes=[pltpu.VMEM((1, _LANE), jnp.float32)] * 4,
        ),
        compiler_params=pltpu.CompilerParams(
            # Both axes must stay sequential: phase 1 needs full-batch stats.
            dimension_semantics=("arbitrary", "arbitrary")),
        cost_estimate=pl.CostEstimate(
            flops=flops, transcendentals=_LANE, bytes_accessed=bytes_accessed),
    )(state, param_slab)

    mean = out[:, :n_actions]
    log_std = out[:, n_actions:2 * n_actions]
    return mean, log_std


# --------------------------------------------------------------------------
# Init + pure-JAX reference (matches the PyTorch forward, training-mode BN)
# --------------------------------------------------------------------------
def init_actor_params(key, s_dim, n_actions, fc1_dim=64, fc2_dim=64):
    ks = jax.random.split(key, 8)

    def lin(kw, kb, fan_in, fan_out):
        bound = 1.0 / jnp.sqrt(fan_in)
        w = jax.random.uniform(kw, (fan_in, fan_out), jnp.float32, -bound, bound)
        b = jax.random.uniform(kb, (1, fan_out), jnp.float32, -bound, bound)
        return w, b

    w1, b1 = lin(ks[0], ks[1], s_dim, fc1_dim)
    w2, b2 = lin(ks[2], ks[3], fc1_dim, fc2_dim)
    wm, bm = lin(ks[4], ks[5], fc2_dim, n_actions)
    ws, bs = lin(ks[6], ks[7], fc2_dim, n_actions)
    gamma = jnp.ones((1, fc1_dim), jnp.float32)
    beta = jnp.zeros((1, fc1_dim), jnp.float32)
    return dict(w1=w1, b1=b1, gamma=gamma, beta=beta,
                w2=w2, b2=b2, wm=wm, bm=bm, ws=ws, bs=bs)


def actor_reference(state, params):
    h1 = state @ params["w1"] + params["b1"]        # reference keeps b1
    mu = jnp.mean(h1, axis=0, keepdims=True)
    var = jnp.mean((h1 - mu) ** 2, axis=0, keepdims=True)
    h1 = (h1 - mu) / jnp.sqrt(var + 1e-5) * params["gamma"] + params["beta"]
    h1 = jnp.maximum(h1, 0.0)
    h2 = jnp.maximum(h1 @ params["w2"] + params["b2"], 0.0)
    mean = h2 @ params["wm"] + params["bm"]
    log_std = jnp.clip(h2 @ params["ws"] + params["bs"], -20.0, 2.0)
    return mean, log_std


# --------------------------------------------------------------------------
if __name__ == "__main__":
    s_dim, n_actions = 16, 8
    key = jax.random.PRNGKey(0)
    k_small, k_params, k_big = jax.random.split(key, 3)

    params = init_actor_params(k_params, s_dim, n_actions)
    slab, meta = pack_params(params)

    # ---- small single-tile case (grid = (2, 1)) ---------------------------
    b_small = 8
    state_small = jax.random.normal(k_small, (b_small, s_dim), jnp.float32)
    mean_s, log_std_s = actor_forward(state_small, slab,
                                      s_dim=s_dim, n_actions=n_actions)
    jax.block_until_ready((mean_s, log_std_s))
    assert mean_s.shape == (b_small, n_actions)
    assert log_std_s.shape == (b_small, n_actions)
    assert bool(jnp.all(log_std_s >= -20.0)) and bool(jnp.all(log_std_s <= 2.0))
    ref_m, ref_l = actor_reference(state_small, params)
    assert bool(jnp.allclose(mean_s, ref_m, atol=5e-4, rtol=5e-4))
    assert bool(jnp.allclose(log_std_s, ref_l, atol=5e-4, rtol=5e-4))

    # ---- batched-rollout case: 2 batch tiles, cross-tile BN statistics ----
    b_big = 256
    state_big = jax.random.normal(k_big, (b_big, s_dim), jnp.float32)
    mean_b, log_std_b = actor_forward(state_big, slab,
                                      s_dim=s_dim, n_actions=n_actions,
                                      batch_tile=128)
    jax.block_until_ready((mean_b, log_std_b))
    ref_mb, ref_lb = actor_reference(state_big, params)
    assert bool(jnp.allclose(mean_b, ref_mb, atol=5e-4, rtol=5e-4))
    assert bool(jnp.allclose(log_std_b, ref_lb, atol=5e-4, rtol=5e-4))

    print("KERNEL_OK")
</pallas_src>

<mosaic_0001>
module attributes {stable_mosaic.version = 11 : i64} {
  func.func @actor_kernel(%arg0: i32, %arg1: i32, %arg2: memref<8x16xf32, #tpu.memory_space<vmem>>, %arg3: memref<280x128xf32, #tpu.memory_space<vmem>>, %arg4: memref<8x128xf32, #tpu.memory_space<vmem>>, %arg5: memref<1x128xf32, #tpu.memory_space<vmem>>, %arg6: memref<1x128xf32, #tpu.memory_space<vmem>>, %arg7: memref<1x128xf32, #tpu.memory_space<vmem>>, %arg8: memref<1x128xf32, #tpu.memory_space<vmem>>) attributes {dimension_semantics = [#tpu.dimension_semantics<arbitrary>, #tpu.dimension_semantics<arbitrary>], iteration_bounds = array<i64: 2, 1>, scalar_prefetch = 0 : i64, scratch_operands = 4 : i64, tpu.core_type = #tpu.core_type<tc>, window_params = [{transform_indices = @transform_0, window_bounds = array<i64: 8, 16>}, {pipeline_mode = #tpu.pipeline_mode<synchronous>, transform_indices = @transform_1, window_bounds = array<i64: 280, 128>}, {transform_indices = @transform_2, window_bounds = array<i64: 8, 128>}]} {
    %c0 = arith.constant 0 : index
    %c0_0 = arith.constant 0 : index
    %0 = vector.load %arg2[%c0, %c0_0] : memref<8x16xf32, #tpu.memory_space<vmem>>, vector<8x16xf32>
    %c8 = arith.constant 8 : index
    %c0_1 = arith.constant 0 : index
    %1 = vector.load %arg3[%c8, %c0_1] : memref<280x128xf32, #tpu.memory_space<vmem>>, vector<16x128xf32>
    %cst = arith.constant dense<0.000000e+00> : vector<8x128xf32>
    %2 = tpu.matmul %0, %1, %cst {dimension_numbers = #tpu.dot_dimension_numbers<[1], [0], [0], [1], [0, 0, 1, 1], [], []>} : vector<8x16xf32>, vector<16x128xf32>, vector<8x128xf32> -> vector<8x128xf32>
    %c0_i32 = arith.constant 0 : i32
    %3 = arith.cmpi eq, %arg0, %c0_i32 : i32
    %4 = arith.extui %3 : i1 to i32
    %c0_i32_2 = arith.constant 0 : i32
    %5 = arith.cmpi ne, %4, %c0_i32_2 : i32
    scf.if %5 {
      %c0_i32_4 = arith.constant 0 : i32
      %9 = arith.cmpi eq, %arg1, %c0_i32_4 : i32
      %10 = arith.extui %9 : i1 to i32
      %c0_i32_5 = arith.constant 0 : i32
      %11 = arith.cmpi ne, %10, %c0_i32_5 : i32
      scf.if %11 {
        %cst_16 = arith.constant 0.000000e+00 : f32
        %23 = vector.broadcast %cst_16 : f32 to vector<1x128xf32>
        %c0_17 = arith.constant 0 : index
        %c0_18 = arith.constant 0 : index
        %24 = vector.load %arg5[%c0_17, %c0_18] : memref<1x128xf32, #tpu.memory_space<vmem>>, vector<1x128xf32>
        tpu.vector_store %arg5[%c0_17, %c0_18], %23 {strides = array<i32>} : memref<1x128xf32, #tpu.memory_space<vmem>>, vector<1x128xf32>,
        %cst_19 = arith.constant 0.000000e+00 : f32
        %25 = vector.broadcast %cst_19 : f32 to vector<1x128xf32>
        %c0_20 = arith.constant 0 : index
        %c0_21 = arith.constant 0 : index
        %26 = vector.load %arg6[%c0_20, %c0_21] : memref<1x128xf32, #tpu.memory_space<vmem>>, vector<1x128xf32>
        tpu.vector_store %arg6[%c0_20, %c0_21], %25 {strides = array<i32>} : memref<1x128xf32, #tpu.memory_space<vmem>>, vector<1x128xf32>,
      } else {
      }
      %c0_6 = arith.constant 0 : index
      %c0_7 = arith.constant 0 : index
      %12 = vector.load %arg5[%c0_6, %c0_7] : memref<1x128xf32, #tpu.memory_space<vmem>>, vector<1x128xf32>
      %cst_8 = arith.constant dense<0.000000e+00> : vector<128xf32>
      %13 = vector.multi_reduction <add>, %2, %cst_8 [0] : vector<8x128xf32> to vector<128xf32>
      %14 = vector.shape_cast %13 : vector<128xf32> to vector<1x128xf32>
      %15 = arith.addf %12, %14 : vector<1x128xf32>
      %c0_9 = arith.constant 0 : index
      %c0_10 = arith.constant 0 : index
      %16 = vector.load %arg5[%c0_9, %c0_10] : memref<1x128xf32, #tpu.memory_space<vmem>>, vector<1x128xf32>
      tpu.vector_store %arg5[%c0_9, %c0_10], %15 {strides = array<i32>} : memref<1x128xf32, #tpu.memory_space<vmem>>, vector<1x128xf32>,
      %c0_11 = arith.constant 0 : index
      %c0_12 = arith.constant 0 : index
      %17 = vector.load %arg6[%c0_11, %c0_12] : memref<1x128xf32, #tpu.memory_space<vmem>>, vector<1x128xf32>
      %18 = arith.mulf %2, %2 : vector<8x128xf32>
      %cst_13 = arith.constant dense<0.000000e+00> : vector<128xf32>
      %19 = vector.multi_reduction <add>, %18, %cst_13 [0] : vector<8x128xf32> to vector<128xf32>
      %20 = vector.shape_cast %19 : vector<128xf32> to vector<1x128xf32>
      %21 = arith.addf %17, %20 : vector<1x128xf32>
      %c0_14 = arith.constant 0 : index
      %c0_15 = arith.constant 0 : index
      %22 = vector.load %arg6[%c0_14, %c0_15] : memref<1x128xf32, #tpu.memory_space<vmem>>, vector<1x128xf32>
      tpu.vector_store %arg6[%c0_14, %c0_15], %21 {strides = array<i32>} : memref<1x128xf32, #tpu.memory_space<vmem>>, vector<1x128xf32>,
    } else {
    }
    %c1_i32 = arith.constant 1 : i32
    %6 = arith.cmpi eq, %arg0, %c1_i32 : i32
    %7 = arith.extui %6 : i1 to i32
    %c0_i32_3 = arith.constant 0 : i32
    %8 = arith.cmpi ne, %7, %c0_i32_3 : i32
    scf.if %8 {
      %c0_i32_4 = arith.constant 0 : i32
      %9 = arith.cmpi eq, %arg1, %c0_i32_4 : i32
      %10 = arith.extui %9 : i1 to i32
      %c0_i32_5 = arith.constant 0 : i32
      %11 = arith.cmpi ne, %10, %c0_i32_5 : i32
      scf.if %11 {
        %c0_22 = arith.constant 0 : index
        %c0_23 = arith.constant 0 : index
        %41 = vector.load %arg3[%c0_22, %c0_23] : memref<280x128xf32, #tpu.memory_space<vmem>>, vector<1x128xf32>
        %c1 = arith.constant 1 : index
        %c0_24 = arith.constant 0 : index
        %42 = vector.load %arg3[%c1, %c0_24] : memref<280x128xf32, #tpu.memory_space<vmem>>, vector<1x128xf32>
        %c0_25 = arith.constant 0 : index
        %c0_26 = arith.constant 0 : index
        %43 = vector.load %arg5[%c0_25, %c0_26] : memref<1x128xf32, #tpu.memory_space<vmem>>, vector<1x128xf32>
        %cst_27 = arith.constant 1.250000e-01 : f32
        %44 = vector.broadcast %cst_27 : f32 to vector<1x128xf32>
        %45 = arith.mulf %43, %44 : vector<1x128xf32>
        %c0_28 = arith.constant 0 : index
        %c0_29 = arith.constant 0 : index
        %46 = vector.load %arg6[%c0_28, %c0_29] : memref<1x128xf32, #tpu.memory_space<vmem>>, vector<1x128xf32>
        %cst_30 = arith.constant 1.250000e-01 : f32
        %47 = vector.broadcast %cst_30 : f32 to vector<1x128xf32>
        %48 = arith.mulf %46, %47 : vector<1x128xf32>
        %49 = arith.mulf %45, %45 : vector<1x128xf32>
        %50 = arith.subf %48, %49 : vector<1x128xf32>
        %cst_31 = arith.constant 0.000000e+00 : f32
        %51 = vector.broadcast %cst_31 : f32 to vector<1x128xf32>
        %52 = arith.maximumf %50, %51 : vector<1x128xf32>
        %cst_32 = arith.constant 9.99999974E-6 : f32
        %53 = vector.broadcast %cst_32 : f32 to vector<1x128xf32>
        %54 = arith.addf %52, %53 : vector<1x128xf32>
        %55 = math.rsqrt %54 : vector<1x128xf32>
        %56 = arith.mulf %41, %55 : vector<1x128xf32>
        %c0_33 = arith.constant 0 : index
        %c0_34 = arith.constant 0 : index
        %57 = vector.load %arg7[%c0_33, %c0_34] : memref<1x128xf32, #tpu.memory_space<vmem>>, vector<1x128xf32>
        tpu.vector_store %arg7[%c0_33, %c0_34], %56 {strides = array<i32>} : memref<1x128xf32, #tpu.memory_space<vmem>>, vector<1x128xf32>,
        %c0_35 = arith.constant 0 : index
        %c0_36 = arith.constant 0 : index
        %58 = vector.load %arg7[%c0_35, %c0_36] : memref<1x128xf32, #tpu.memory_space<vmem>>, vector<1x128xf32>
        %59 = arith.mulf %45, %58 : vector<1x128xf32>
        %60 = arith.subf %42, %59 : vector<1x128xf32>
        %c0_37 = arith.constant 0 : index
        %c0_38 = arith.constant 0 : index
        %61 = vector.load %arg8[%c0_37, %c0_38] : memref<1x128xf32, #tpu.memory_space<vmem>>, vector<1x128xf32>
        tpu.vector_store %arg8[%c0_37, %c0_38], %60 {strides = array<i32>} : memref<1x128xf32, #tpu.memory_space<vmem>>, vector<1x128xf32>,
      } else {
      }
      %c0_6 = arith.constant 0 : index
      %c0_7 = arith.constant 0 : index
      %12 = vector.load %arg7[%c0_6, %c0_7] : memref<1x128xf32, #tpu.memory_space<vmem>>, vector<1x128xf32>
      %13 = vector.broadcast %12 : vector<1x128xf32> to vector<8x128xf32>
      %14 = arith.mulf %2, %13 : vector<8x128xf32>
      %c0_8 = arith.constant 0 : index
      %c0_9 = arith.constant 0 : index
      %15 = vector.load %arg8[%c0_8, %c0_9] : memref<1x128xf32, #tpu.memory_space<vmem>>, vector<1x128xf32>
      %16 = vector.broadcast %15 : vector<1x128xf32> to vector<8x128xf32>
      %17 = arith.addf %14, %16 : vector<8x128xf32>
      %cst_10 = arith.constant 0.000000e+00 : f32
      %18 = vector.broadcast %cst_10 : f32 to vector<8x128xf32>
      %19 = arith.maximumf %17, %18 : vector<8x128xf32>
      %c2 = arith.constant 2 : index
      %c0_11 = arith.constant 0 : index
      %20 = vector.load %arg3[%c2, %c0_11] : memref<280x128xf32, #tpu.memory_space<vmem>>, vector<1x128xf32>
      %c24 = arith.constant 24 : index
      %c0_12 = arith.constant 0 : index
      %21 = vector.load %arg3[%c24, %c0_12] : memref<280x128xf32, #tpu.memory_space<vmem>>, vector<128x128xf32>
      %cst_13 = arith.constant dense<0.000000e+00> : vector<8x128xf32>
      %22 = tpu.matmul %19, %21, %cst_13 {dimension_numbers = #tpu.dot_dimension_numbers<[1], [0], [0], [1], [0, 0, 1, 1], [], []>} : vector<8x128xf32>, vector<128x128xf32>, vector<8x128xf32> -> vector<8x128xf32>
      %23 = vector.broadcast %20 : vector<1x128xf32> to vector<8x128xf32>
      %24 = arith.addf %22, %23 : vector<8x128xf32>
      %cst_14 = arith.constant 0.000000e+00 : f32
      %25 = vector.broadcast %cst_14 : f32 to vector<8x128xf32>
      %26 = arith.maximumf %24, %25 : vector<8x128xf32>
      %c3 = arith.constant 3 : index
      %c0_15 = arith.constant 0 : index
      %27 = vector.load %arg3[%c3, %c0_15] : memref<280x128xf32, #tpu.memory_space<vmem>>, vector<1x128xf32>
      %c152 = arith.constant 152 : index
      %c0_16 = arith.constant 0 : index
      %28 = vector.load %arg3[%c152, %c0_16] : memref<280x128xf32, #tpu.memory_space<vmem>>, vector<128x128xf32>
      %cst_17 = arith.constant dense<0.000000e+00> : vector<8x128xf32>
      %29 = tpu.matmul %26, %28, %cst_17 {dimension_numbers = #tpu.dot_dimension_numbers<[1], [0], [0], [1], [0, 0, 1, 1], [], []>} : vector<8x128xf32>, vector<128x128xf32>, vector<8x128xf32> -> vector<8x128xf32>
      %30 = vector.broadcast %27 : vector<1x128xf32> to vector<8x128xf32>
      %31 = arith.addf %29, %30 : vector<8x128xf32>
      %32 = tpu.iota {dimensions = array<i32: 1>} : vector<8x128xi32>
      %c8_i32 = arith.constant 8 : i32
      %33 = vector.broadcast %c8_i32 : i32 to vector<8x128xi32>
      %34 = arith.cmpi sge, %32, %33 : vector<8x128xi32>
      %cst_18 = arith.constant -2.000000e+01 : f32
      %cst_19 = arith.constant 2.000000e+00 : f32
      %35 = vector.broadcast %cst_18 : f32 to vector<8x128xf32>
      %36 = arith.maximumf %35, %31 : vector<8x128xf32>
      %37 = vector.broadcast %cst_19 : f32 to vector<8x128xf32>
      %38 = arith.minimumf %37, %36 : vector<8x128xf32>
      %39 = arith.select %34, %38, %31 : vector<8x128xi1>, vector<8x128xf32>
      %c0_20 = arith.constant 0 : index
      %c0_21 = arith.constant 0 : index
      %40 = vector.load %arg4[%c0_20, %c0_21] : memref<8x128xf32, #tpu.memory_space<vmem>>, vector<8x128xf32>
      tpu.vector_store %arg4[%c0_20, %c0_21], %39 {strides = array<i32>} : memref<8x128xf32, #tpu.memory_space<vmem>>, vector<8x128xf32>,
    } else {
    }
    return
  }
  func.func @transform_0(%arg0: i32, %arg1: i32) -> (i32, i32) {
    %c0_i32 = arith.constant 0 : i32
    %c0_i32_0 = arith.constant 0 : i32
    return %arg1, %c0_i32 : i32, i32
  }
  func.func @transform_1(%arg0: i32, %arg1: i32) -> (i32, i32) {
    %c0_i32 = arith.constant 0 : i32
    %c0_i32_0 = arith.constant 0 : i32
    %c0_i32_1 = arith.constant 0 : i32
    return %c0_i32, %c0_i32_0 : i32, i32
  }
  func.func @transform_2(%arg0: i32, %arg1: i32) -> (i32, i32) {
    %c0_i32 = arith.constant 0 : i32
    %c0_i32_0 = arith.constant 0 : i32
    return %arg1, %c0_i32 : i32, i32
  }
}

</mosaic_0001>

<llo_original>
// kernel: tpu_custom_call.1
$region0: #{tpu_custom_call.1}
  #allocation0 [shape = 'u32[]', space=smem, size = 0x4, offset = 0x4, fixed_abs, tag = 'smem constant byte address 0x4 - core index']
  #allocation1 [shape = 'u32[144,128]{1,0:T(1,128)}', space=vmem, size = 0x12000, scoped, tag = 'internal scratch']
  #allocation2 [shape = 'f32[1,128]{1,0:T(1,128)}', space=vmem, size = 0x200, scoped, tag = 'scratch operand']
  #allocation3 [shape = 'f32[1,128]{1,0:T(1,128)}', space=vmem, size = 0x200, scoped, tag = 'scratch operand']
  #allocation4 [shape = 'f32[1,128]{1,0:T(1,128)}', space=vmem, size = 0x200, scoped, tag = 'scratch operand']
  #allocation5 [shape = 'f32[1,128]{1,0:T(1,128)}', space=vmem, size = 0x200, scoped, tag = 'scratch operand']
  %s0 = inlined_call_operand.hbm [shape: f32[8,16], index: 0, kind: input, shape index: {}]
  %s1 = inlined_call_operand.hbm [shape: f32[280,128], index: 1, kind: input, shape index: {}]
  %s2 = inlined_call_operand.hbm [shape: f32[8,128], index: 2, kind: output, shape index: {}]
  %s3 = sld [smem:[#allocation0]]
  $region65: #{tpu_custom_call.1} parent=0
    _
  %s5 = ssub.s32 1, %s3
  %s6 = scalar_select 0, %s5, %s3
  $region1: #{tpu_custom_call.1} parent=0
    #allocation6 [shape = 'u8[4096]{0}', space=vmem, size = 0x1000, scoped, tag = 'input window, operand 0, single buffered']
    #allocation7 [shape = 's32[2]{0}', space=sflag, size = 0x8, scoped, tag = 'scoped memory for tpu_custom_call.1']
    #allocation8 [shape = 's32[2]{0}', space=sflag, size = 0x8, scoped, tag = 'scoped memory for tpu_custom_call.1']
    #allocation9 [shape = 'u8[143360]{0}', space=vmem, size = 0x23000, scoped, tag = 'input window, operand 1, single buffered']
    #allocation10 [shape = 's32[1]{0}', space=sflag, size = 0x4, scoped, tag = 'scoped memory for tpu_custom_call.1']
    #allocation11 [shape = 'u8[4096]{0}', space=vmem, size = 0x1000, scoped, tag = 'output window, operand 0, single buffered']
    %7 = vsyncpa [#allocation7], 0
    %8 = vsyncpa [#allocation10], 0
    %9 = vsyncpa [#allocation8], 0
    loop: start=0, step=1, limit=4
    $region2: #{tpu_custom_call.1} parent=1 // loop_pre_header
      _
    $region3: #{tpu_custom_call.1} parent=1 // loop_header
      %s11 = sphi 0, %s15
      %p12 = scmp.ge.s32.totalorder %s11, 4
      %s18 = sphi 0, %s30
      %s19 = sphi 0, %s26
      %s20 = sphi 0, %s18
      %s21 = sphi 0, %s19
      %s22 = sphi 0, %s20
      %s23 = sphi 0, %s21
      %s33 = sphi 0, %s35
      %s36 = sphi 0, %s33
      %s37 = sphi 0, %s36
      %s53 = sphi 0, %s37
      %s57 = sphi 0, %s57
      %s59 = sphi 0, %s57
      %s60 = sphi 0, %s59
      %s74 = sphi 0, %s60
      %s80 = sphi 0, %s82
      %s83 = sphi 0, %s80
      %s84 = sphi 0, %s83
      %s100 = sphi 0, %s84
    $region4: #{tpu_custom_call.1} parent=1 // loop_header_branch
      %14 = sbr.rel (%p12) target = $region8
    $region5: #{tpu_custom_call.1} parent=1 // loop_body
      %s16 = ssub.s32 %s11, 1
      %s17 = ssub.s32 %s11, 2
      %s24 = sadd.s32 1, %s19
      %p25 = scmp.ge.s32.totalorder %s24, 1
      %s26 = scalar_select %p25, 0, %s24
      %s27 = sadd.s32 1, %s18
      %s28 = scalar_select %p25, %s27, %s18
      %p29 = scmp.ge.s32.totalorder %s28, 2
      %s30 = scalar_select %p29, 0, %s28
      %s31 = ssub.s32 %s19, %s26
      %p32 = scmp.eq.s32.totalorder %s31, 0
      %s34 = sadd.s32 %s33, 1
      %s35 = scalar_select %p32, %s33, %s34
      %p38 = pneg %p32
      %p39 = scmp.eq.s32.totalorder %s11, 1
      %p40 = por %p38, %p39
      %p41 = scmp.ne.s32.totalorder %s33, %s36
      %p42 = scmp.eq.s32.totalorder %s11, 0
      %p43 = por %p41, %p42
      %p44 = scmp.ne.s32.totalorder %s33, %s36
      %p45 = scmp.eq.s32.totalorder %s16, 1
      %p46 = por %p44, %p45
      %p47 = scmp.ne.s32.totalorder %s36, %s37
      %p48 = scmp.eq.s32.totalorder %s16, 0
      %p49 = por %p47, %p48
      %p50 = scmp.ne.s32.totalorder %s36, %s37
      %p51 = scmp.eq.s32.totalorder %s17, 1
      %p52 = por %p50, %p51
      %p54 = scmp.ne.s32.totalorder %s37, %s53
      %p55 = scmp.eq.s32.totalorder %s17, 0
      %p56 = por %p54, %p55
      %s58 = sadd.s32 %s57, 1
      %p61 = scmp.eq.s32.totalorder %s11, 1
      %p62 = scmp.ne.s32.totalorder %s57, %s59
      %p63 = scmp.eq.s32.totalorder %s11, 0
      %p64 = por %p62, %p63
      %p65 = scmp.ne.s32.totalorder %s57, %s59
      %p66 = scmp.eq.s32.totalorder %s16, 1
      %p67 = por %p65, %p66
      %p68 = scmp.ne.s32.totalorder %s59, %s60
      %p69 = scmp.eq.s32.totalorder %s16, 0
      %p70 = por %p68, %p69
      %p71 = scmp.ne.s32.totalorder %s59, %s60
      %p72 = scmp.eq.s32.totalorder %s17, 1
      %p73 = por %p71, %p72
      %p75 = scmp.ne.s32.totalorder %s60, %s74
      %p76 = scmp.eq.s32.totalorder %s17, 0
      %p77 = por %p75, %p76
      %s78 = ssub.s32 %s19, %s26
      %p79 = scmp.eq.s32.totalorder %s78, 0
      %s81 = sadd.s32 %s80, 1
      %s82 = scalar_select %p79, %s80, %s81
      %p85 = pneg %p79
      %p86 = scmp.eq.s32.totalorder %s11, 1
      %p87 = por %p85, %p86
      %p88 = scmp.ne.s32.totalorder %s80, %s83
      %p89 = scmp.eq.s32.totalorder %s11, 0
      %p90 = por %p88, %p89
      %p91 = scmp.ne.s32.totalorder %s80, %s83
      %p92 = scmp.eq.s32.totalorder %s16, 1
      %p93 = por %p91, %p92
      %p94 = scmp.ne.s32.totalorder %s83, %s84
      %p95 = scmp.eq.s32.totalorder %s16, 0
      %p96 = por %p94, %p95
      %p97 = scmp.ne.s32.totalorder %s83, %s84
      %p98 = scmp.eq.s32.totalorder %s17, 1
      %p99 = por %p97, %p98
      %p101 = scmp.ne.s32.totalorder %s84, %s100
      %p102 = scmp.eq.s32.totalorder %s17, 0
      %p103 = por %p101, %p102
      %p104 = scmp.le.s32.totalorder 1, %s11
      %p105 = scmp.lt.s32.totalorder %s11, 3
      %p106 = pnand %p104, %p105
      %p107 = pneg %p106
      // Predicated region
      $region9: #{tpu_custom_call.1} parent=5 // pred_check
        _
      $region10: #{tpu_custom_call.1} parent=5 // pred_check_branch
        %109 = sbr.rel (%p106) target = $region12
      $region11: #{tpu_custom_call.1} parent=5 // pred_region
        %s110 = ssub.s32 %s11, 1
        // Predicated region
        $region13: #{tpu_custom_call.1} parent=11 // pred_check
          %p111 = pneg %p49
        $region14: #{tpu_custom_call.1} parent=11 // pred_check_branch
          %113 = sbr.rel (%p111) target = $region16
        $region15: #{tpu_custom_call.1} parent=11 // pred_region
          %s115 = ssub.s32 128, 128
          %116 = vsyncadd [#allocation7], %s115
          %s117 = smul.addr %s21, 128
          %s118 = scalar_lea.hbm %s0, %s117
          %s120 = sshll.u32 [#allocation6], 4
          %s121 = int_to_ptr.vmem [resolvable:$true] %s120
          %123 = dma.hbm_to_vmem [thread:$0]  %s118, 128, %s121, [#allocation7]
        $region16: #{tpu_custom_call.1} parent=11 // pred_fallthru
          _
        // Predicated region
        $region17: #{tpu_custom_call.1} parent=11 // pred_check
          %p124 = pneg %p70
        $region18: #{tpu_custom_call.1} parent=11 // pred_check_branch
          %126 = sbr.rel (%p124) target = $region20
        $region19: #{tpu_custom_call.1} parent=11 // pred_region
          %s128 = ssub.s32 4480, 4480
          %129 = vsyncadd [#allocation10], %s128
          %s130 = sshll.u32 [#allocation9], 4
          %s131 = int_to_ptr.vmem [resolvable:$true] %s130
          %136 = dma.hbm_to_vmem [thread:$0]  %s1, 4480, %s131, [#allocation10], 128, 128, 8
        $region20: #{tpu_custom_call.1} parent=11 // pred_fallthru
          _
      $region12: #{tpu_custom_call.1} parent=5 // pred_fallthru
        _
      %p137 = scmp.lt.s32.totalorder %s11, 2
      // Predicated region
      $region21: #{tpu_custom_call.1} parent=5 // pred_check
        %p138 = pneg %p137
      $region22: #{tpu_custom_call.1} parent=5 // pred_check_branch
        %140 = sbr.rel (%p138) target = $region24
      $region23: #{tpu_custom_call.1} parent=5 // pred_region
        _
      $region24: #{tpu_custom_call.1} parent=5 // pred_fallthru
        _
      %p141 = scmp.le.s32.totalorder 1, %s11
      %p142 = scmp.lt.s32.totalorder %s11, 3
      %p143 = pnand %p141, %p142
      %p144 = pneg %p143
      // Predicated region
      $region25: #{tpu_custom_call.1} parent=5 // pred_check
        _
      $region26: #{tpu_custom_call.1} parent=5 // pred_check_branch
        %146 = sbr.rel (%p143) target = $region28
      $region27: #{tpu_custom_call.1} parent=5 // pred_region
        %s147 = ssub.s32 %s11, 1
        // Predicated region
        $region29: #{tpu_custom_call.1} parent=27 // pred_check
          %p148 = pneg %p49
        $region30: #{tpu_custom_call.1} parent=27 // pred_check_branch
          %150 = sbr.rel (%p148) target = $region32
        $region31: #{tpu_custom_call.1} parent=27 // pred_region
          %151 = dma.done [#allocation7], 128
        $region32: #{tpu_custom_call.1} parent=27 // pred_fallthru
          _
        // Predicated region
        $region33: #{tpu_custom_call.1} parent=27 // pred_check
          %p152 = pneg %p70
        $region34: #{tpu_custom_call.1} parent=27 // pred_check_branch
          %154 = sbr.rel (%p152) target = $region36
        $region35: #{tpu_custom_call.1} parent=27 // pred_region
          %155 = dma.done [#allocation10], 4480
        $region36: #{tpu_custom_call.1} parent=27 // pred_fallthru
          _
        %p156 = pneg %p49
        %p157 = pneg %p46
        %p158 = pneg %p70
        %p159 = pneg %p67
        %p160 = pneg %p96
        %p161 = pneg %p93
        %v162 = vld [vmem:[#allocation6] sm:$0xff]
        %v163 = vld [vmem:[#allocation9 + $0x8] sm:$0xff]
        %v164 = vld [vmem:[#allocation9 + $0x10] sm:$0xff]
        %vm165 = vcmask 130048
        %v167 = vsel %vm165, %v162, 0
        %169 = vmatprep.subr.mxu0 0.0
        %170 = vmatpush1.msra.mxu0 0.0
        %171 = vmatprep.subr.mxu0 0.0
        %172 = vmatpush1.msra.mxu0 0.0
        %173 = vmatprep.subr.mxu0 0.0
        %174 = vmatpush1.msra.mxu0 0.0
        %175 = vmatprep.subr.mxu0 0.0
        %176 = vmatpush1.msra.mxu0 0.0
        %177 = vmatprep.subr.mxu0 0.0
        %178 = vmatpush1.msra.mxu0 0.0
        %179 = vmatprep.subr.mxu0 0.0
        %180 = vmatpush1.msra.mxu0 0.0
        %181 = vmatprep.subr.mxu0 0.0
        %182 = vmatpush1.msra.mxu0 0.0
        %183 = vmatprep.subr.mxu0 0.0
        %184 = vmatpush1.msra.mxu0 0.0
        %185 = vmatprep.subr.mxu0 0.0
        %186 = vmatpush1.msra.mxu0 0.0
        %187 = vmatprep.subr.mxu0 0.0
        %188 = vmatpush1.msra.mxu0 0.0
        %189 = vmatprep.subr.mxu0 0.0
        %190 = vmatpush1.msra.mxu0 0.0
        %191 = vmatprep.subr.mxu0 0.0
        %192 = vmatpush1.msra.mxu0 0.0
        %193 = vmatprep.subr.mxu0 0.0
        %194 = vmatpush1.msra.mxu0 0.0
        %195 = vmatprep.subr.mxu0 0.0
        %196 = vmatpush1.msra.mxu0 0.0
        %197 = vmatprep.subr.mxu0 0.0
        %198 = vmatpush1.msra.mxu0 %v164
        %199 = vmatprep.subr.mxu0 0.0
        %200 = vmatpush1.msra.mxu0 %v163
        %201 = vmatprep.subr.mxu0 0.0
        %202 = vmatpush2.msra.mxu0 0.0
        %203 = vmatprep.subr.mxu0 0.0
        %204 = vmatpush2.msra.mxu0 0.0
        %205 = vmatprep.subr.mxu0 0.0
        %206 = vmatpush2.msra.mxu0 0.0
        %207 = vmatprep.subr.mxu0 0.0
        %208 = vmatpush2.msra.mxu0 0.0
        %209 = vmatprep.subr.mxu0 0.0
        %210 = vmatpush2.msra.mxu0 0.0
        %211 = vmatprep.subr.mxu0 0.0
        %212 = vmatpush2.msra.mxu0 0.0
        %213 = vmatprep.subr.mxu0 0.0
        %214 = vmatpush2.msra.mxu0 0.0
        %215 = vmatprep.subr.mxu0 0.0
        %216 = vmatpush2.msra.mxu0 0.0
        %217 = vmatprep.subr.mxu0 0.0
        %218 = vmatpush2.msra.mxu0 0.0
        %219 = vmatprep.subr.mxu0 0.0
        %220 = vmatpush2.msra.mxu0 0.0
        %221 = vmatprep.subr.mxu0 0.0
        %222 = vmatpush2.msra.mxu0 0.0
        %223 = vmatprep.subr.mxu0 0.0
        %224 = vmatpush2.msra.mxu0 0.0
        %225 = vmatprep.subr.mxu0 0.0
        %226 = vmatpush2.msra.mxu0 0.0
        %227 = vmatprep.subr.mxu0 0.0
        %228 = vmatpush2.msra.mxu0 0.0
        %229 = vmatprep.subr.mxu0 0.0
        %230 = vmatpush2.msra.mxu0 0.0
        %231 = vmatprep.subr.mxu0 0.0
        %232 = vmatpush2.msra.mxu0 0.0
        %233 = vmatprep.mubr.f32.mxu0 0.0
        %234 = vmatmul.mubr.f32.gmra.mxu0 %v167
        %v235 = vpop.f32.mrf.mxu0
        %v236 = vadd.f32 0.0, %v235
        %v237 = vpop.f32.mrf.mxu0
        %238 = vdwg.mxu0
        %p239 = scmp.eq.s32.totalorder %s20, 0
        // Predicated region
        $region37: #{tpu_custom_call.1} parent=27 // pred_check
          %p240 = pneg %p239
        $region38: #{tpu_custom_call.1} parent=27 // pred_check_branch
          %242 = sbr.rel (%p240) target = $region40
        $region39: #{tpu_custom_call.1} parent=27 // pred_region
          %p243 = scmp.eq.s32.totalorder %s21, 0
          // Predicated region
          $region41: #{tpu_custom_call.1} parent=39 // pred_check
            %p244 = pneg %p243
          $region42: #{tpu_custom_call.1} parent=39 // pred_check_branch
            %246 = sbr.rel (%p244) target = $region44
          $region43: #{tpu_custom_call.1} parent=39 // pred_region
            %247 = vst [vmem:[#allocation2] sm:$0x1] 0.0
            %248 = vst [vmem:[#allocation3] sm:$0x1] 0.0
          $region44: #{tpu_custom_call.1} parent=39 // pred_fallthru
            _
          %v249 = vld [vmem:[#allocation2] sm:$0x1]
          %v250 = vrot.slane %v236, 4
          %v251 = vadd.f32 %v236, %v250
          %v252 = vrot.slane %v251, 2
          %v253 = vadd.f32 %v251, %v252
          %v254 = vrot.slane %v253, 1
          %v255 = vadd.f32 %v253, %v254
          %v256 = vadd.f32 %v249, %v255
          %257 = vst [vmem:[#allocation2] sm:$0x1] %v256
          %v258 = vld [vmem:[#allocation3] sm:$0x1]
          %v259 = vmul.f32 %v236, %v236
          %v260 = vrot.slane %v259, 4
          %v261 = vadd.f32 %v259, %v260
          %v262 = vrot.slane %v261, 2
          %v263 = vadd.f32 %v261, %v262
          %v264 = vrot.slane %v263, 1
          %v265 = vadd.f32 %v263, %v264
          %v266 = vadd.f32 %v258, %v265
          %267 = vst [vmem:[#allocation3] sm:$0x1] %v266
        $region40: #{tpu_custom_call.1} parent=27 // pred_fallthru
          _
        %p268 = scmp.eq.s32.totalorder %s20, 1
        // Predicated region
        $region45: #{tpu_custom_call.1} parent=27 // pred_check
          %p269 = pneg %p268
        $region46: #{tpu_custom_call.1} parent=27 // pred_check_branch
          %271 = sbr.rel (%p269) target = $region48
        $region47: #{tpu_custom_call.1} parent=27 // pred_region
          %p272 = scmp.eq.s32.totalorder %s21, 0
          // Predicated region
          $region49: #{tpu_custom_call.1} parent=47 // pred_check
            %p273 = pneg %p272
          $region50: #{tpu_custom_call.1} parent=47 // pred_check_branch
            %275 = sbr.rel (%p273) target = $region52
          $region51: #{tpu_custom_call.1} parent=47 // pred_region
            %v276 = vld [vmem:[#allocation9] sm:$0x1]
            %v277 = vld [vmem:[#allocation9 + $0x1] sm:$0x1]
            %v278 = vld [vmem:[#allocation2] sm:$0x1]
            %v279 = vmul.f32 %v278, 0.125
            %v280 = vld [vmem:[#allocation3] sm:$0x1]
            %v281 = vmul.f32 %v280, 0.125
            %v282 = vmul.f32 %v279, %v279
            %v283 = vsub.f32 %v281, %v282
            %v284 = vmax.f32 %v283, 0.0
            %v285 = vadd.f32 %v284, 1e-05
            %v286 = vrsqrt.pop %v285
            %v287 = vmul.f32 %v276, %v286
            %288 = vst [vmem:[#allocation4] sm:$0x1] %v287
            %v289 = vld [vmem:[#allocation4] sm:$0x1]
            %v290 = vmul.f32 %v279, %v289
            %v291 = vsub.f32 %v277, %v290
            %292 = vst [vmem:[#allocation5] sm:$0x1] %v291
          $region52: #{tpu_custom_call.1} parent=47 // pred_fallthru
            _
          %v293 = vld [vmem:[#allocation4] sm:$0x1]
          %v295 = vlaneseq
          %v296 = vshrl.u32 %v295, 7
          %v297 = vsub.s32 0, %v296
          %v298 = vrot.slane %v293, %v297
          %v300 = vmul.f32 %v236, %v298
          %v301 = vld [vmem:[#allocation5] sm:$0x1]
          %v303 = vlaneseq
          %v304 = vshrl.u32 %v303, 7
          %v305 = vsub.s32 0, %v304
          %v306 = vrot.slane %v301, %v305
          %v308 = vadd.f32 %v300, %v306
          %v309 = vmax.f32 %v308, 0.0
          %v310 = vld [vmem:[#allocation9 + $0x2] sm:$0x1]
          %v311 = vld [vmem:[#allocation9 + $0x18] sm:$0xff]
          %v312 = vld [vmem:[#allocation9 + $0x20] sm:$0xff]
          %v313 = vld [vmem:[#allocation9 + $0x28] sm:$0xff]
          %v314 = vld [vmem:[#allocation9 + $0x30] sm:$0xff]
          %v315 = vld [vmem:[#allocation9 + $0x38] sm:$0xff]
          %v316 = vld [vmem:[#allocation9 + $0x40] sm:$0xff]
          %v317 = vld [vmem:[#allocation9 + $0x48] sm:$0xff]
          %v318 = vld [vmem:[#allocation9 + $0x50] sm:$0xff]
          %v319 = vld [vmem:[#allocation9 + $0x58] sm:$0xff]
          %v320 = vld [vmem:[#allocation9 + $0x60] sm:$0xff]
          %v321 = vld [vmem:[#allocation9 + $0x68] sm:$0xff]
          %v322 = vld [vmem:[#allocation9 + $0x70] sm:$0xff]
          %v323 = vld [vmem:[#allocation9 + $0x78] sm:$0xff]
          %v324 = vld [vmem:[#allocation9 + $0x80] sm:$0xff]
          %v325 = vld [vmem:[#allocation9 + $0x88] sm:$0xff]
          %v326 = vld [vmem:[#allocation9 + $0x90] sm:$0xff]
          %v327 = vlaneseq
          %v328 = vshrl.u32 %v327, 7
          %v329 = vsub.s32 0, %v328
          %v330 = vrot.slane %v310, %v329
          %331 = vmatprep.subr.mxu0 0.0
          %332 = vmatpush1.msra.mxu0 %v326
          %333 = vmatprep.subr.mxu0 0.0
          %334 = vmatpush1.msra.mxu0 %v325
          %335 = vmatprep.subr.mxu0 0.0
          %336 = vmatpush1.msra.mxu0 %v324
          %337 = vmatprep.subr.mxu0 0.0
          %338 = vmatpush1.msra.mxu0 %v323
          %339 = vmatprep.subr.mxu0 0.0
          %340 = vmatpush1.msra.mxu0 %v322
          %341 = vmatprep.subr.mxu0 0.0
          %342 = vmatpush1.msra.mxu0 %v321
          %343 = vmatprep.subr.mxu0 0.0
          %344 = vmatpush1.msra.mxu0 %v320
          %345 = vmatprep.subr.mxu0 0.0
          %346 = vmatpush1.msra.mxu0 %v319
          %347 = vmatprep.subr.mxu0 0.0
          %348 = vmatpush1.msra.mxu0 %v318
          %349 = vmatprep.subr.mxu0 0.0
          %350 = vmatpush1.msra.mxu0 %v317
          %351 = vmatprep.subr.mxu0 0.0
          %352 = vmatpush1.msra.mxu0 %v316
          %353 = vmatprep.subr.mxu0 0.0
          %354 = vmatpush1.msra.mxu0 %v315
          %355 = vmatprep.subr.mxu0 0.0
          %356 = vmatpush1.msra.mxu0 %v314
          %357 = vmatprep.subr.mxu0 0.0
          %358 = vmatpush1.msra.mxu0 %v313
          %359 = vmatprep.subr.mxu0 0.0
          %360 = vmatpush1.msra.mxu0 %v312
          %361 = vmatprep.subr.mxu0 0.0
          %362 = vmatpush1.msra.mxu0 %v311
          %363 = vmatprep.subr.mxu0 0.0
          %364 = vmatpush2.msra.mxu0 0.0
          %365 = vmatprep.subr.mxu0 0.0
          %366 = vmatpush2.msra.mxu0 0.0
          %367 = vmatprep.subr.mxu0 0.0
          %368 = vmatpush2.msra.mxu0 0.0
          %369 = vmatprep.subr.mxu0 0.0
          %370 = vmatpush2.msra.mxu0 0.0
          %371 = vmatprep.subr.mxu0 0.0
          %372 = vmatpush2.msra.mxu0 0.0
          %373 = vmatprep.subr.mxu0 0.0
          %374 = vmatpush2.msra.mxu0 0.0
          %375 = vmatprep.subr.mxu0 0.0
          %376 = vmatpush2.msra.mxu0 0.0
          %377 = vmatprep.subr.mxu0 0.0
          %378 = vmatpush2.msra.mxu0 0.0
          %379 = vmatprep.subr.mxu0 0.0
          %380 = vmatpush2.msra.mxu0 0.0
          %381 = vmatprep.subr.mxu0 0.0
          %382 = vmatpush2.msra.mxu0 0.0
          %383 = vmatprep.subr.mxu0 0.0
          %384 = vmatpush2.msra.mxu0 0.0
          %385 = vmatprep.subr.mxu0 0.0
          %386 = vmatpush2.msra.mxu0 0.0
          %387 = vmatprep.subr.mxu0 0.0
          %388 = vmatpush2.msra.mxu0 0.0
          %389 = vmatprep.subr.mxu0 0.0
          %390 = vmatpush2.msra.mxu0 0.0
          %391 = vmatprep.subr.mxu0 0.0
          %392 = vmatpush2.msra.mxu0 0.0
          %393 = vmatprep.subr.mxu0 0.0
          %394 = vmatpush2.msra.mxu0 0.0
          %395 = vmatprep.mubr.f32.mxu0 0.0
          %396 = vmatmul.mubr.f32.gmra.mxu0 %v309
          %v397 = vpop.f32.mrf.mxu0
          %v398 = vadd.f32 %v330, %v397
          %v399 = vpop.f32.mrf.mxu0
          %400 = vdwg.mxu0
          %v401 = vmax.f32 %v398, 0.0
          %v402 = vld [vmem:[#allocation9 + $0x3] sm:$0x1]
          %v403 = vld [vmem:[#allocation9 + $0x98] sm:$0xff]
          %v404 = vld [vmem:[#allocation9 + $0xa0] sm:$0xff]
          %v405 = vld [vmem:[#allocation9 + $0xa8] sm:$0xff]
          %v406 = vld [vmem:[#allocation9 + $0xb0] sm:$0xff]
          %v407 = vld [vmem:[#allocation9 + $0xb8] sm:$0xff]
          %v408 = vld [vmem:[#allocation9 + $0xc0] sm:$0xff]
          %v409 = vld [vmem:[#allocation9 + $0xc8] sm:$0xff]
          %v410 = vld [vmem:[#allocation9 + $0xd0] sm:$0xff]
          %v411 = vld [vmem:[#allocation9 + $0xd8] sm:$0xff]
          %v412 = vld [vmem:[#allocation9 + $0xe0] sm:$0xff]
          %v413 = vld [vmem:[#allocation9 + $0xe8] sm:$0xff]
          %v414 = vld [vmem:[#allocation9 + $0xf0] sm:$0xff]
          %v415 = vld [vmem:[#allocation9 + $0xf8] sm:$0xff]
          %v416 = vld [vmem:[#allocation9 + $0x100] sm:$0xff]
          %v417 = vld [vmem:[#allocation9 + $0x108] sm:$0xff]
          %v418 = vld [vmem:[#allocation9 + $0x110] sm:$0xff]
          %v419 = vlaneseq
          %v420 = vshrl.u32 %v419, 7
          %v421 = vsub.s32 0, %v420
          %v422 = vrot.slane %v402, %v421
          %423 = vmatprep.subr.mxu0 0.0
          %424 = vmatpush1.msra.mxu0 %v418
          %425 = vmatprep.subr.mxu0 0.0
          %426 = vmatpush1.msra.mxu0 %v417
          %427 = vmatprep.subr.mxu0 0.0
          %428 = vmatpush1.msra.mxu0 %v416
          %429 = vmatprep.subr.mxu0 0.0
          %430 = vmatpush1.msra.mxu0 %v415
          %431 = vmatprep.subr.mxu0 0.0
          %432 = vmatpush1.msra.mxu0 %v414
          %433 = vmatprep.subr.mxu0 0.0
          %434 = vmatpush1.msra.mxu0 %v413
          %435 = vmatprep.subr.mxu0 0.0
          %436 = vmatpush1.msra.mxu0 %v412
          %437 = vmatprep.subr.mxu0 0.0
          %438 = vmatpush1.msra.mxu0 %v411
          %439 = vmatprep.subr.mxu0 0.0
          %440 = vmatpush1.msra.mxu0 %v410
          %441 = vmatprep.subr.mxu0 0.0
          %442 = vmatpush1.msra.mxu0 %v409
          %443 = vmatprep.subr.mxu0 0.0
          %444 = vmatpush1.msra.mxu0 %v408
          %445 = vmatprep.subr.mxu0 0.0
          %446 = vmatpush1.msra.mxu0 %v407
          %447 = vmatprep.subr.mxu0 0.0
          %448 = vmatpush1.msra.mxu0 %v406
          %449 = vmatprep.subr.mxu0 0.0
          %450 = vmatpush1.msra.mxu0 %v405
          %451 = vmatprep.subr.mxu0 0.0
          %452 = vmatpush1.msra.mxu0 %v404
          %453 = vmatprep.subr.mxu0 0.0
          %454 = vmatpush1.msra.mxu0 %v403
          %455 = vmatprep.subr.mxu0 0.0
          %456 = vmatpush2.msra.mxu0 0.0
          %457 = vmatprep.subr.mxu0 0.0
          %458 = vmatpush2.msra.mxu0 0.0
          %459 = vmatprep.subr.mxu0 0.0
          %460 = vmatpush2.msra.mxu0 0.0
          %461 = vmatprep.subr.mxu0 0.0
          %462 = vmatpush2.msra.mxu0 0.0
          %463 = vmatprep.subr.mxu0 0.0
          %464 = vmatpush2.msra.mxu0 0.0
          %465 = vmatprep.subr.mxu0 0.0
          %466 = vmatpush2.msra.mxu0 0.0
          %467 = vmatprep.subr.mxu0 0.0
          %468 = vmatpush2.msra.mxu0 0.0
          %469 = vmatprep.subr.mxu0 0.0
          %470 = vmatpush2.msra.mxu0 0.0
          %471 = vmatprep.subr.mxu0 0.0
          %472 = vmatpush2.msra.mxu0 0.0
          %473 = vmatprep.subr.mxu0 0.0
          %474 = vmatpush2.msra.mxu0 0.0
          %475 = vmatprep.subr.mxu0 0.0
          %476 = vmatpush2.msra.mxu0 0.0
          %477 = vmatprep.subr.mxu0 0.0
          %478 = vmatpush2.msra.mxu0 0.0
          %479 = vmatprep.subr.mxu0 0.0
          %480 = vmatpush2.msra.mxu0 0.0
          %481 = vmatprep.subr.mxu0 0.0
          %482 = vmatpush2.msra.mxu0 0.0
          %483 = vmatprep.subr.mxu0 0.0
          %484 = vmatpush2.msra.mxu0 0.0
          %485 = vmatprep.subr.mxu0 0.0
          %486 = vmatpush2.msra.mxu0 0.0
          %487 = vmatprep.mubr.f32.mxu0 0.0
          %488 = vmatmul.mubr.f32.gmra.mxu0 %v401
          %v489 = vpop.f32.mrf.mxu0
          %v490 = vadd.f32 %v422, %v489
          %v491 = vpop.f32.mrf.mxu0
          %492 = vdwg.mxu0
          %v493 = vlaneseq
          %v494 = vand.u32 %v493, 127
          %vm495 = vcmp.ge.s32.totalorder %v494, 8
          %v496 = vmax.f32 %v490, -20.0
          %v497 = vmin.f32 %v496, 2.0
          %v498 = vsel %vm495, %v497, %v490
          %499 = vst [vmem:[#allocation11] sm:$0xff] %v498
        $region48: #{tpu_custom_call.1} parent=27 // pred_fallthru
          _
        // Predicated region
        $region53: #{tpu_custom_call.1} parent=27 // pred_check
          %p500 = pneg %p93
        $region54: #{tpu_custom_call.1} parent=27 // pred_check_branch
          %502 = sbr.rel (%p500) target = $region56
        $region55: #{tpu_custom_call.1} parent=27 // pred_region
          %s504 = ssub.s32 128, 128
          %505 = vsyncadd [#allocation8], %s504
          %s506 = smul.addr %s21, 128
          %s507 = scalar_lea.hbm %s2, %s506
          %s509 = sshll.u32 [#allocation11], 4
          %s510 = int_to_ptr.vmem [resolvable:$true] %s509
          %512 = dma.vmem_to_hbm [thread:$0]  %s510, 128, %s507, [#allocation8]
        $region56: #{tpu_custom_call.1} parent=27 // pred_fallthru
          _
        // Predicated region
        $region57: #{tpu_custom_call.1} parent=27 // pred_check
          %p513 = pneg %p93
        $region58: #{tpu_custom_call.1} parent=27 // pred_check_branch
          %515 = sbr.rel (%p513) target = $region60
        $region59: #{tpu_custom_call.1} parent=27 // pred_region
          %516 = dma.done [#allocation8], 128
        $region60: #{tpu_custom_call.1} parent=27 // pred_fallthru
          _
      $region28: #{tpu_custom_call.1} parent=5 // pred_fallthru
        _
      %p517 = scmp.le.s32.totalorder 2, %s11
      // Predicated region
      $region61: #{tpu_custom_call.1} parent=5 // pred_check
        %p518 = pneg %p517
      $region62: #{tpu_custom_call.1} parent=5 // pred_check_branch
        %520 = sbr.rel (%p518) target = $region64
      $region63: #{tpu_custom_call.1} parent=5 // pred_region
        %s521 = ssub.s32 %s11, 2
      $region64: #{tpu_custom_call.1} parent=5 // pred_fallthru
        _
    $region6: #{tpu_custom_call.1} parent=1 // loop_footer
      %s15 = sadd.s32 1, %s11
    $region7: #{tpu_custom_call.1} parent=1 // loop_footer_branch
      %10 = sbr.rel target = $region3
    $region8: #{tpu_custom_call.1} parent=1 // loop_exit
      _
    %522 = vsyncpa [#allocation7], 1
    %s523 = scalar_lea.sflag [#allocation7], 1
    %524 = vsyncpa %s523, 1
    %525 = vsyncpa [#allocation10], 1
    %526 = vsyncpa [#allocation8], 1
    %s527 = scalar_lea.sflag [#allocation8], 1
    %528 = vsyncpa %s527, 1

</llo_original>
